<compile_context>
chip_gen: v7x
topology: tpu7x:2x2x1
jax: 0.10.0
libtpu: 0.0.40
codegen_flags: <defaults>
</compile_context>

<pallas_src>
import functools

import jax
import jax.numpy as jnp
from jax import lax
from jax.experimental import pallas as pl
from jax.experimental.pallas import tpu as pltpu


def normed_linear_kernel(x_ref, w_ref, o_ref, acc_ref, xs_ref, ws_ref):
    k = pl.program_id(2)

    @pl.when(k == 0)
    def _init():
        acc_ref[...] = jnp.zeros_like(acc_ref)
        xs_ref[...] = jnp.zeros_like(xs_ref)
        ws_ref[...] = jnp.zeros_like(ws_ref)

    x = x_ref[...]  # (TM, TK)
    w = w_ref[...]  # (TK, TN)

    # Accumulate squared norms in f32 (VPU/XLU work is O(1/TM + 1/TN) of the
    # MXU flops -> negligible).
    xf = x.astype(jnp.float32)
    wf = w.astype(jnp.float32)
    xs_ref[...] += jnp.sum(xf * xf, axis=1, keepdims=True)   # (TM, 1)
    ws_ref[...] += jnp.sum(wf * wf, axis=0, keepdims=True)   # (1, TN)

    # bf16 MXU matmul with f32 accumulation.
    acc_ref[...] += jnp.dot(
        x.astype(jnp.bfloat16),
        w.astype(jnp.bfloat16),
        preferred_element_type=jnp.float32,
    )

    @pl.when(k == pl.num_programs(2) - 1)
    def _finalize():
        eps2 = jnp.float32(1e-24)  # == (1e-12)^2, matches F.normalize clamp
        inv_xn = lax.rsqrt(jnp.maximum(xs_ref[...], eps2))   # (TM, 1)
        inv_wn = lax.rsqrt(jnp.maximum(ws_ref[...], eps2))   # (1, TN)
        o_ref[...] = (acc_ref[...] * inv_xn * inv_wn).astype(o_ref.dtype)


@functools.partial(jax.jit, static_argnames=("tm", "tn", "tk"))
def normed_linear(x, weight, *, tm=128, tn=128, tk=256):
    """x: (N, in_features), weight: (in_features, out_features) -> (N, out_features) f32."""
    N, K = x.shape
    K2, M = weight.shape
    assert K == K2, "in_features mismatch"

    # Pad every dim to a tile multiple (keeps blocks (8,128)-aligned and the
    # output lane-dense). Zero padding is exact for both the sumsq and the dot.
    Np = pl.cdiv(N, tm) * tm
    Kp = pl.cdiv(K, tk) * tk
    Mp = pl.cdiv(M, tn) * tn
    xp = jnp.pad(x, ((0, Np - N), (0, Kp - K)))
    wp = jnp.pad(weight, ((0, Kp - K), (0, Mp - M)))

    grid = (Np // tm, Mp // tn, Kp // tk)

    out = pl.pallas_call(
        normed_linear_kernel,
        out_shape=jax.ShapeDtypeStruct((Np, Mp), jnp.float32),
        grid_spec=pltpu.PrefetchScalarGridSpec(
            num_scalar_prefetch=0,
            grid=grid,
            in_specs=[
                pl.BlockSpec((tm, tk), lambda i, j, k: (i, k)),
                pl.BlockSpec((tk, tn), lambda i, j, k: (k, j)),
            ],
            out_specs=pl.BlockSpec((tm, tn), lambda i, j, k: (i, j)),
            scratch_shapes=[
                pltpu.VMEM((tm, tn), jnp.float32),  # matmul accumulator
                pltpu.VMEM((tm, 1), jnp.float32),   # row sumsq of x
                pltpu.VMEM((1, tn), jnp.float32),   # col sumsq of w
            ],
        ),
        compiler_params=pltpu.CompilerParams(
            dimension_semantics=("parallel", "parallel", "arbitrary"),
        ),
    )(xp, wp)

    return out[:N, :M]


def init_normed_linear_weight(key, in_features, out_features):
    """Replica of: torch.Tensor(in, out).uniform_(-1,1).renorm_(2, 1, 1e-5).mul_(1e5).
    renorm_(2, dim=1, maxnorm=1e-5) scales each column so its L2 norm <= 1e-5,
    then mul by 1e5 -> columns have ~unit norm."""
    w = jax.random.uniform(
        key, (in_features, out_features), minval=-1.0, maxval=1.0,
        dtype=jnp.float32,
    )
    col_norm = jnp.linalg.norm(w, axis=0, keepdims=True)   # (1, out)
    scale = jnp.where(col_norm > 1e-5, 1e-5 / (col_norm + 1e-7), 1.0)
    return w * scale * 1e5


def reference_normed_linear(x, weight):
    eps = 1e-12
    xn = x / jnp.maximum(jnp.linalg.norm(x, axis=1, keepdims=True), eps)
    wn = weight / jnp.maximum(
        jnp.linalg.norm(weight, axis=0, keepdims=True), eps
    )
    return xn @ wn


if __name__ == "__main__":
    key = jax.random.PRNGKey(0)
    k_x, k_w = jax.random.split(key)

    batch = 8
    in_features = 32
    out_features = 16

    x = jax.random.normal(k_x, (batch, in_features), dtype=jnp.float32)
    weight = init_normed_linear_weight(k_w, in_features, out_features)

    out = normed_linear(x, weight)
    out = jax.block_until_ready(out)

    ref = reference_normed_linear(x, weight)
    assert out.shape == (batch, out_features)
    # bf16 MXU inputs (f32 accumulation) -> loosened tolerance vs pure f32.
    assert jnp.allclose(out, ref, atol=2e-2, rtol=2e-2), "mismatch vs reference"
    # Outputs are cosine similarities; sanity-check range.
    assert jnp.all(jnp.abs(out) <= 1.0 + 1e-3)

    print("KERNEL_OK")
</pallas_src>

<mosaic_0001>
module attributes {stable_mosaic.version = 11 : i64} {
  func.func @normed_linear_kernel(%arg0: i32, %arg1: i32, %arg2: i32, %arg3: memref<128x256xf32, #tpu.memory_space<vmem>>, %arg4: memref<256x128xf32, #tpu.memory_space<vmem>>, %arg5: memref<128x128xf32, #tpu.memory_space<vmem>>, %arg6: memref<128x128xf32, #tpu.memory_space<vmem>>, %arg7: memref<128x1xf32, #tpu.memory_space<vmem>>, %arg8: memref<1x128xf32, #tpu.memory_space<vmem>>) attributes {dimension_semantics = [#tpu.dimension_semantics<parallel>, #tpu.dimension_semantics<parallel>, #tpu.dimension_semantics<arbitrary>], iteration_bounds = array<i64: 1, 1, 1>, scalar_prefetch = 0 : i64, scratch_operands = 3 : i64, tpu.core_type = #tpu.core_type<tc>, window_params = [{transform_indices = @transform_0, window_bounds = array<i64: 128, 256>}, {transform_indices = @transform_1, window_bounds = array<i64: 256, 128>}, {transform_indices = @transform_2, window_bounds = array<i64: 128, 128>}]} {
    %c0_i32 = arith.constant 0 : i32
    %0 = arith.cmpi eq, %arg2, %c0_i32 : i32
    %1 = arith.extui %0 : i1 to i32
    %c0_i32_0 = arith.constant 0 : i32
    %2 = arith.cmpi ne, %1, %c0_i32_0 : i32
    scf.if %2 {
      %cst_20 = arith.constant 0.000000e+00 : f32
      %26 = vector.broadcast %cst_20 : f32 to vector<128x128xf32>
      %c0_21 = arith.constant 0 : index
      %c0_22 = arith.constant 0 : index
      %27 = vector.load %arg6[%c0_21, %c0_22] : memref<128x128xf32, #tpu.memory_space<vmem>>, vector<128x128xf32>
      tpu.vector_store %arg6[%c0_21, %c0_22], %26 {strides = array<i32>} : memref<128x128xf32, #tpu.memory_space<vmem>>, vector<128x128xf32>,
      %cst_23 = arith.constant 0.000000e+00 : f32
      %28 = vector.broadcast %cst_23 : f32 to vector<128x1xf32>
      %c0_24 = arith.constant 0 : index
      %c0_25 = arith.constant 0 : index
      %29 = vector.load %arg7[%c0_24, %c0_25] : memref<128x1xf32, #tpu.memory_space<vmem>>, vector<128x1xf32>
      tpu.vector_store %arg7[%c0_24, %c0_25], %28 {strides = array<i32>} : memref<128x1xf32, #tpu.memory_space<vmem>>, vector<128x1xf32>,
      %cst_26 = arith.constant 0.000000e+00 : f32
      %30 = vector.broadcast %cst_26 : f32 to vector<1x128xf32>
      %c0_27 = arith.constant 0 : index
      %c0_28 = arith.constant 0 : index
      %31 = vector.load %arg8[%c0_27, %c0_28] : memref<1x128xf32, #tpu.memory_space<vmem>>, vector<1x128xf32>
      tpu.vector_store %arg8[%c0_27, %c0_28], %30 {strides = array<i32>} : memref<1x128xf32, #tpu.memory_space<vmem>>, vector<1x128xf32>,
    } else {
    }
    %c0 = arith.constant 0 : index
    %c0_1 = arith.constant 0 : index
    %3 = vector.load %arg3[%c0, %c0_1] : memref<128x256xf32, #tpu.memory_space<vmem>>, vector<128x256xf32>
    %c0_2 = arith.constant 0 : index
    %c0_3 = arith.constant 0 : index
    %4 = vector.load %arg4[%c0_2, %c0_3] : memref<256x128xf32, #tpu.memory_space<vmem>>, vector<256x128xf32>
    %c0_4 = arith.constant 0 : index
    %c0_5 = arith.constant 0 : index
    %5 = vector.load %arg7[%c0_4, %c0_5] : memref<128x1xf32, #tpu.memory_space<vmem>>, vector<128x1xf32>
    %6 = arith.mulf %3, %3 : vector<128x256xf32>
    %cst = arith.constant dense<0.000000e+00> : vector<128xf32>
    %7 = vector.multi_reduction <add>, %6, %cst [1] : vector<128x256xf32> to vector<128xf32>
    %8 = vector.shape_cast %7 : vector<128xf32> to vector<128x1xf32>
    %9 = arith.addf %5, %8 : vector<128x1xf32>
    %c0_6 = arith.constant 0 : index
    %c0_7 = arith.constant 0 : index
    %10 = vector.load %arg7[%c0_6, %c0_7] : memref<128x1xf32, #tpu.memory_space<vmem>>, vector<128x1xf32>
    tpu.vector_store %arg7[%c0_6, %c0_7], %9 {strides = array<i32>} : memref<128x1xf32, #tpu.memory_space<vmem>>, vector<128x1xf32>,
    %c0_8 = arith.constant 0 : index
    %c0_9 = arith.constant 0 : index
    %11 = vector.load %arg8[%c0_8, %c0_9] : memref<1x128xf32, #tpu.memory_space<vmem>>, vector<1x128xf32>
    %12 = arith.mulf %4, %4 : vector<256x128xf32>
    %cst_10 = arith.constant dense<0.000000e+00> : vector<128xf32>
    %13 = vector.multi_reduction <add>, %12, %cst_10 [0] : vector<256x128xf32> to vector<128xf32>
    %14 = vector.shape_cast %13 : vector<128xf32> to vector<1x128xf32>
    %15 = arith.addf %11, %14 : vector<1x128xf32>
    %c0_11 = arith.constant 0 : index
    %c0_12 = arith.constant 0 : index
    %16 = vector.load %arg8[%c0_11, %c0_12] : memref<1x128xf32, #tpu.memory_space<vmem>>, vector<1x128xf32>
    tpu.vector_store %arg8[%c0_11, %c0_12], %15 {strides = array<i32>} : memref<1x128xf32, #tpu.memory_space<vmem>>, vector<1x128xf32>,
    %c0_13 = arith.constant 0 : index
    %c0_14 = arith.constant 0 : index
    %17 = vector.load %arg6[%c0_13, %c0_14] : memref<128x128xf32, #tpu.memory_space<vmem>>, vector<128x128xf32>
    %18 = arith.truncf %3 : vector<128x256xf32> to vector<128x256xbf16>
    %19 = arith.truncf %4 : vector<256x128xf32> to vector<256x128xbf16>
    %cst_15 = arith.constant dense<0.000000e+00> : vector<128x128xf32>
    %20 = tpu.matmul %18, %19, %cst_15 {dimension_numbers = #tpu.dot_dimension_numbers<[1], [0], [0], [1], [0, 0, 1, 1], [], []>} : vector<128x256xbf16>, vector<256x128xbf16>, vector<128x128xf32> -> vector<128x128xf32>
    %21 = arith.addf %17, %20 : vector<128x128xf32>
    %c0_16 = arith.constant 0 : index
    %c0_17 = arith.constant 0 : index
    %22 = vector.load %arg6[%c0_16, %c0_17] : memref<128x128xf32, #tpu.memory_space<vmem>>, vector<128x128xf32>
    tpu.vector_store %arg6[%c0_16, %c0_17], %21 {strides = array<i32>} : memref<128x128xf32, #tpu.memory_space<vmem>>, vector<128x128xf32>,
    %c0_i32_18 = arith.constant 0 : i32
    %23 = arith.cmpi eq, %arg2, %c0_i32_18 : i32
    %24 = arith.extui %23 : i1 to i32
    %c0_i32_19 = arith.constant 0 : i32
    %25 = arith.cmpi ne, %24, %c0_i32_19 : i32
    scf.if %25 {
      %c0_20 = arith.constant 0 : index
      %c0_21 = arith.constant 0 : index
      %26 = vector.load %arg7[%c0_20, %c0_21] : memref<128x1xf32, #tpu.memory_space<vmem>>, vector<128x1xf32>
      %cst_22 = arith.constant 1.000000e-24 : f32
      %27 = vector.broadcast %cst_22 : f32 to vector<128x1xf32>
      %28 = arith.maximumf %26, %27 : vector<128x1xf32>
      %29 = math.rsqrt %28 : vector<128x1xf32>
      %c0_23 = arith.constant 0 : index
      %c0_24 = arith.constant 0 : index
      %30 = vector.load %arg8[%c0_23, %c0_24] : memref<1x128xf32, #tpu.memory_space<vmem>>, vector<1x128xf32>
      %cst_25 = arith.constant 1.000000e-24 : f32
      %31 = vector.broadcast %cst_25 : f32 to vector<1x128xf32>
      %32 = arith.maximumf %30, %31 : vector<1x128xf32>
      %33 = math.rsqrt %32 : vector<1x128xf32>
      %c0_26 = arith.constant 0 : index
      %c0_27 = arith.constant 0 : index
      %34 = vector.load %arg6[%c0_26, %c0_27] : memref<128x128xf32, #tpu.memory_space<vmem>>, vector<128x128xf32>
      %35 = vector.broadcast %29 : vector<128x1xf32> to vector<128x128xf32>
      %36 = arith.mulf %34, %35 : vector<128x128xf32>
      %37 = vector.broadcast %33 : vector<1x128xf32> to vector<128x128xf32>
      %38 = arith.mulf %36, %37 : vector<128x128xf32>
      %c0_28 = arith.constant 0 : index
      %c0_29 = arith.constant 0 : index
      %39 = vector.load %arg5[%c0_28, %c0_29] : memref<128x128xf32, #tpu.memory_space<vmem>>, vector<128x128xf32>
      tpu.vector_store %arg5[%c0_28, %c0_29], %38 {strides = array<i32>} : memref<128x128xf32, #tpu.memory_space<vmem>>, vector<128x128xf32>,
    } else {
    }
    return
  }
  func.func @transform_0(%arg0: i32, %arg1: i32, %arg2: i32) -> (i32, i32) {
    %c0_i32 = arith.constant 0 : i32
    return %arg0, %arg2 : i32, i32
  }
  func.func @transform_1(%arg0: i32, %arg1: i32, %arg2: i32) -> (i32, i32) {
    %c0_i32 = arith.constant 0 : i32
    return %arg2, %arg1 : i32, i32
  }
  func.func @transform_2(%arg0: i32, %arg1: i32, %arg2: i32) -> (i32, i32) {
    %c0_i32 = arith.constant 0 : i32
    return %arg0, %arg1 : i32, i32
  }
}

</mosaic_0001>

<llo_original>
// kernel: normed_linear.1
$region0: #{normed_linear.1}
  #allocation0 [shape = 'u32[]', space=smem, size = 0x4, offset = 0x4, fixed_abs, tag = 'smem constant byte address 0x4 - core index']
  #allocation1 [shape = 'u32[144,128]{1,0:T(1,128)}', space=vmem, size = 0x12000, scoped, tag = 'internal scratch']
  #allocation2 [shape = 'f32[128,128]{1,0:T(8,128)}', space=vmem, size = 0x10000, scoped, tag = 'scratch operand']
  #allocation3 [shape = 'f32[128,1]{1,0:T(8,128)}', space=vmem, size = 0x10000, scoped, tag = 'scratch operand']
  #allocation4 [shape = 'f32[1,128]{1,0:T(1,128)}', space=vmem, size = 0x200, scoped, tag = 'scratch operand']
  %s0 = inlined_call_operand.vmem [shape: f32[128,256], index: 0, kind: input, shape index: {}]
  %s1 = inlined_call_operand.vmem [shape: f32[256,128], index: 1, kind: input, shape index: {}]
  %s2 = inlined_call_operand.vmem [shape: f32[128,128], index: 2, kind: output, shape index: {}]
  %s3 = sld [smem:[#allocation0]]
  $region26: #{normed_linear.1} parent=0
    _
  %s5 = ssub.s32 1, %s3
  %s6 = scalar_select 0, %s5, %s3
  // Predicated region
  $region2: #{normed_linear.1} parent=0 // pred_check
    _
  $region3: #{normed_linear.1} parent=0 // pred_check_branch
    %8 = sbr.rel (0) target = $region5
  $region4: #{normed_linear.1} parent=0 // pred_region
    _
  $region5: #{normed_linear.1} parent=0 // pred_fallthru
    _
  // Predicated region
  $region6: #{normed_linear.1} parent=0 // pred_check
    _
  $region7: #{normed_linear.1} parent=0 // pred_check_branch
    %10 = sbr.rel (0) target = $region9
  $region8: #{normed_linear.1} parent=0 // pred_region
    _
  $region9: #{normed_linear.1} parent=0 // pred_fallthru
    _
  %p12 = scmp.eq.s32.totalorder 0, 0
  // Predicated region
  $region10: #{normed_linear.1} parent=0 // pred_check
    %p13 = pneg %p12
  $region11: #{normed_linear.1} parent=0 // pred_check_branch
    %15 = sbr.rel (%p13) target = $region13
  $region12: #{normed_linear.1} parent=0 // pred_region
    %16 = vst [vmem:[#allocation2] sm:$0xff] 0.0
    %17 = vst [vmem:[#allocation2 + $0x8] sm:$0xff] 0.0
    %18 = vst [vmem:[#allocation2 + $0x10] sm:$0xff] 0.0
    %19 = vst [vmem:[#allocation2 + $0x18] sm:$0xff] 0.0
    %20 = vst [vmem:[#allocation2 + $0x20] sm:$0xff] 0.0
    %21 = vst [vmem:[#allocation2 + $0x28] sm:$0xff] 0.0
    %22 = vst [vmem:[#allocation2 + $0x30] sm:$0xff] 0.0
    %23 = vst [vmem:[#allocation2 + $0x38] sm:$0xff] 0.0
    %24 = vst [vmem:[#allocation2 + $0x40] sm:$0xff] 0.0
    %25 = vst [vmem:[#allocation2 + $0x48] sm:$0xff] 0.0
    %26 = vst [vmem:[#allocation2 + $0x50] sm:$0xff] 0.0
    %27 = vst [vmem:[#allocation2 + $0x58] sm:$0xff] 0.0
    %28 = vst [vmem:[#allocation2 + $0x60] sm:$0xff] 0.0
    %29 = vst [vmem:[#allocation2 + $0x68] sm:$0xff] 0.0
    %30 = vst [vmem:[#allocation2 + $0x70] sm:$0xff] 0.0
    %31 = vst [vmem:[#allocation2 + $0x78] sm:$0xff] 0.0
    %vm32 = vcmask 7168
    %33 = vst.msk [vmem:[#allocation3] sm:$0xff] %vm32, 0.0
    %34 = vst.msk [vmem:[#allocation3 + $0x8] sm:$0xff] %vm32, 0.0
    %35 = vst.msk [vmem:[#allocation3 + $0x10] sm:$0xff] %vm32, 0.0
    %36 = vst.msk [vmem:[#allocation3 + $0x18] sm:$0xff] %vm32, 0.0
    %37 = vst.msk [vmem:[#allocation3 + $0x20] sm:$0xff] %vm32, 0.0
    %38 = vst.msk [vmem:[#allocation3 + $0x28] sm:$0xff] %vm32, 0.0
    %39 = vst.msk [vmem:[#allocation3 + $0x30] sm:$0xff] %vm32, 0.0
    %40 = vst.msk [vmem:[#allocation3 + $0x38] sm:$0xff] %vm32, 0.0
    %41 = vst.msk [vmem:[#allocation3 + $0x40] sm:$0xff] %vm32, 0.0
    %42 = vst.msk [vmem:[#allocation3 + $0x48] sm:$0xff] %vm32, 0.0
    %43 = vst.msk [vmem:[#allocation3 + $0x50] sm:$0xff] %vm32, 0.0
    %44 = vst.msk [vmem:[#allocation3 + $0x58] sm:$0xff] %vm32, 0.0
    %45 = vst.msk [vmem:[#allocation3 + $0x60] sm:$0xff] %vm32, 0.0
    %46 = vst.msk [vmem:[#allocation3 + $0x68] sm:$0xff] %vm32, 0.0
    %47 = vst.msk [vmem:[#allocation3 + $0x70] sm:$0xff] %vm32, 0.0
    %48 = vst.msk [vmem:[#allocation3 + $0x78] sm:$0xff] %vm32, 0.0
    %49 = vst [vmem:[#allocation4] sm:$0x1] 0.0
  $region13: #{normed_linear.1} parent=0 // pred_fallthru
    _
  %v50 = vld [vmem:[%s0] sm:$0xff]
  %v51 = vld [vmem:[%s0 + $0x8] sm:$0xff]
  %v52 = vld [vmem:[%s0 + $0x10] sm:$0xff]
  %v53 = vld [vmem:[%s0 + $0x18] sm:$0xff]
  %v54 = vld [vmem:[%s0 + $0x20] sm:$0xff]
  %v55 = vld [vmem:[%s0 + $0x28] sm:$0xff]
  %v56 = vld [vmem:[%s0 + $0x30] sm:$0xff]
  %v57 = vld [vmem:[%s0 + $0x38] sm:$0xff]
  %v58 = vld [vmem:[%s0 + $0x40] sm:$0xff]
  %v59 = vld [vmem:[%s0 + $0x48] sm:$0xff]
  %v60 = vld [vmem:[%s0 + $0x50] sm:$0xff]
  %v61 = vld [vmem:[%s0 + $0x58] sm:$0xff]
  %v62 = vld [vmem:[%s0 + $0x60] sm:$0xff]
  %v63 = vld [vmem:[%s0 + $0x68] sm:$0xff]
  %v64 = vld [vmem:[%s0 + $0x70] sm:$0xff]
  %v65 = vld [vmem:[%s0 + $0x78] sm:$0xff]
  %v66 = vld [vmem:[%s0 + $0x80] sm:$0xff]
  %v67 = vld [vmem:[%s0 + $0x88] sm:$0xff]
  %v68 = vld [vmem:[%s0 + $0x90] sm:$0xff]
  %v69 = vld [vmem:[%s0 + $0x98] sm:$0xff]
  %v70 = vld [vmem:[%s0 + $0xa0] sm:$0xff]
  %v71 = vld [vmem:[%s0 + $0xa8] sm:$0xff]
  %v72 = vld [vmem:[%s0 + $0xb0] sm:$0xff]
  %v73 = vld [vmem:[%s0 + $0xb8] sm:$0xff]
  %v74 = vld [vmem:[%s0 + $0xc0] sm:$0xff]
  %v75 = vld [vmem:[%s0 + $0xc8] sm:$0xff]
  %v76 = vld [vmem:[%s0 + $0xd0] sm:$0xff]
  %v77 = vld [vmem:[%s0 + $0xd8] sm:$0xff]
  %v78 = vld [vmem:[%s0 + $0xe0] sm:$0xff]
  %v79 = vld [vmem:[%s0 + $0xe8] sm:$0xff]
  %v80 = vld [vmem:[%s0 + $0xf0] sm:$0xff]
  %v81 = vld [vmem:[%s0 + $0xf8] sm:$0xff]
  %v82 = vld [vmem:[%s1] sm:$0xff]
  %v83 = vld [vmem:[%s1 + $0x8] sm:$0xff]
  %v84 = vld [vmem:[%s1 + $0x10] sm:$0xff]
  %v85 = vld [vmem:[%s1 + $0x18] sm:$0xff]
  %v86 = vld [vmem:[%s1 + $0x20] sm:$0xff]
  %v87 = vld [vmem:[%s1 + $0x28] sm:$0xff]
  %v88 = vld [vmem:[%s1 + $0x30] sm:$0xff]
  %v89 = vld [vmem:[%s1 + $0x38] sm:$0xff]
  %v90 = vld [vmem:[%s1 + $0x40] sm:$0xff]
  %v91 = vld [vmem:[%s1 + $0x48] sm:$0xff]
  %v92 = vld [vmem:[%s1 + $0x50] sm:$0xff]
  %v93 = vld [vmem:[%s1 + $0x58] sm:$0xff]
  %v94 = vld [vmem:[%s1 + $0x60] sm:$0xff]
  %v95 = vld [vmem:[%s1 + $0x68] sm:$0xff]
  %v96 = vld [vmem:[%s1 + $0x70] sm:$0xff]
  %v97 = vld [vmem:[%s1 + $0x78] sm:$0xff]
  %v98 = vld [vmem:[%s1 + $0x80] sm:$0xff]
  %v99 = vld [vmem:[%s1 + $0x88] sm:$0xff]
  %v100 = vld [vmem:[%s1 + $0x90] sm:$0xff]
  %v101 = vld [vmem:[%s1 + $0x98] sm:$0xff]
  %v102 = vld [vmem:[%s1 + $0xa0] sm:$0xff]
  %v103 = vld [vmem:[%s1 + $0xa8] sm:$0xff]
  %v104 = vld [vmem:[%s1 + $0xb0] sm:$0xff]
  %v105 = vld [vmem:[%s1 + $0xb8] sm:$0xff]
  %v106 = vld [vmem:[%s1 + $0xc0] sm:$0xff]
  %v107 = vld [vmem:[%s1 + $0xc8] sm:$0xff]
  %v108 = vld [vmem:[%s1 + $0xd0] sm:$0xff]
  %v109 = vld [vmem:[%s1 + $0xd8] sm:$0xff]
  %v110 = vld [vmem:[%s1 + $0xe0] sm:$0xff]
  %v111 = vld [vmem:[%s1 + $0xe8] sm:$0xff]
  %v112 = vld [vmem:[%s1 + $0xf0] sm:$0xff]
  %v113 = vld [vmem:[%s1 + $0xf8] sm:$0xff]
  %v114 = vld [vmem:[#allocation3] sm:$0xff]
  %v115 = vld [vmem:[#allocation3 + $0x8] sm:$0xff]
  %v116 = vld [vmem:[#allocation3 + $0x10] sm:$0xff]
  %v117 = vld [vmem:[#allocation3 + $0x18] sm:$0xff]
  %v118 = vld [vmem:[#allocation3 + $0x20] sm:$0xff]
  %v119 = vld [vmem:[#allocation3 + $0x28] sm:$0xff]
  %v120 = vld [vmem:[#allocation3 + $0x30] sm:$0xff]
  %v121 = vld [vmem:[#allocation3 + $0x38] sm:$0xff]
  %v122 = vld [vmem:[#allocation3 + $0x40] sm:$0xff]
  %v123 = vld [vmem:[#allocation3 + $0x48] sm:$0xff]
  %v124 = vld [vmem:[#allocation3 + $0x50] sm:$0xff]
  %v125 = vld [vmem:[#allocation3 + $0x58] sm:$0xff]
  %v126 = vld [vmem:[#allocation3 + $0x60] sm:$0xff]
  %v127 = vld [vmem:[#allocation3 + $0x68] sm:$0xff]
  %v128 = vld [vmem:[#allocation3 + $0x70] sm:$0xff]
  %v129 = vld [vmem:[#allocation3 + $0x78] sm:$0xff]
  %v130 = vmul.f32 %v50, %v50
  %v131 = vmul.f32 %v51, %v51
  %v132 = vmul.f32 %v52, %v52
  %v133 = vmul.f32 %v53, %v53
  %v134 = vmul.f32 %v54, %v54
  %v135 = vmul.f32 %v55, %v55
  %v136 = vmul.f32 %v56, %v56
  %v137 = vmul.f32 %v57, %v57
  %v138 = vmul.f32 %v58, %v58
  %v139 = vmul.f32 %v59, %v59
  %v140 = vmul.f32 %v60, %v60
  %v141 = vmul.f32 %v61, %v61
  %v142 = vmul.f32 %v62, %v62
  %v143 = vmul.f32 %v63, %v63
  %v144 = vmul.f32 %v64, %v64
  %v145 = vmul.f32 %v65, %v65
  %v146 = vmul.f32 %v66, %v66
  %v147 = vmul.f32 %v67, %v67
  %v148 = vmul.f32 %v68, %v68
  %v149 = vmul.f32 %v69, %v69
  %v150 = vmul.f32 %v70, %v70
  %v151 = vmul.f32 %v71, %v71
  %v152 = vmul.f32 %v72, %v72
  %v153 = vmul.f32 %v73, %v73
  %v154 = vmul.f32 %v74, %v74
  %v155 = vmul.f32 %v75, %v75
  %v156 = vmul.f32 %v76, %v76
  %v157 = vmul.f32 %v77, %v77
  %v158 = vmul.f32 %v78, %v78
  %v159 = vmul.f32 %v79, %v79
  %v160 = vmul.f32 %v80, %v80
  %v161 = vmul.f32 %v81, %v81
  %v162 = vadd.f32 %v130, %v131
  %163 = vadd.xlane.f32.xlu0 %v162
  %v164 = vpop.xlane.xlu0 %163
  %v165 = vadd.f32 %v132, %v133
  %166 = vadd.xlane.f32.xlu0 %v165
  %v167 = vpop.xlane.xlu0 %166
  %v168 = vadd.f32 %v134, %v135
  %169 = vadd.xlane.f32.xlu0 %v168
  %v170 = vpop.xlane.xlu0 %169
  %v171 = vadd.f32 %v136, %v137
  %172 = vadd.xlane.f32.xlu0 %v171
  %v173 = vpop.xlane.xlu0 %172
  %v174 = vadd.f32 %v138, %v139
  %175 = vadd.xlane.f32.xlu0 %v174
  %v176 = vpop.xlane.xlu0 %175
  %v177 = vadd.f32 %v140, %v141
  %178 = vadd.xlane.f32.xlu0 %v177
  %v179 = vpop.xlane.xlu0 %178
  %v180 = vadd.f32 %v142, %v143
  %181 = vadd.xlane.f32.xlu0 %v180
  %v182 = vpop.xlane.xlu0 %181
  %v183 = vadd.f32 %v144, %v145
  %184 = vadd.xlane.f32.xlu0 %v183
  %v185 = vpop.xlane.xlu0 %184
  %v186 = vadd.f32 %v146, %v147
  %187 = vadd.xlane.f32.xlu0 %v186
  %v188 = vpop.xlane.xlu0 %187
  %v189 = vadd.f32 %v148, %v149
  %190 = vadd.xlane.f32.xlu0 %v189
  %v191 = vpop.xlane.xlu0 %190
  %v192 = vadd.f32 %v150, %v151
  %193 = vadd.xlane.f32.xlu0 %v192
  %v194 = vpop.xlane.xlu0 %193
  %v195 = vadd.f32 %v152, %v153
  %196 = vadd.xlane.f32.xlu0 %v195
  %v197 = vpop.xlane.xlu0 %196
  %v198 = vadd.f32 %v154, %v155
  %199 = vadd.xlane.f32.xlu0 %v198
  %v200 = vpop.xlane.xlu0 %199
  %v201 = vadd.f32 %v156, %v157
  %202 = vadd.xlane.f32.xlu0 %v201
  %v203 = vpop.xlane.xlu0 %202
  %v204 = vadd.f32 %v158, %v159
  %205 = vadd.xlane.f32.xlu0 %v204
  %v206 = vpop.xlane.xlu0 %205
  %v207 = vadd.f32 %v160, %v161
  %208 = vadd.xlane.f32.xlu0 %v207
  %v209 = vpop.xlane.xlu0 %208
  %v210 = vadd.f32 %v114, %v164
  %v211 = vadd.f32 %v115, %v167
  %v212 = vadd.f32 %v116, %v170
  %v213 = vadd.f32 %v117, %v173
  %v214 = vadd.f32 %v118, %v176
  %v215 = vadd.f32 %v119, %v179
  %v216 = vadd.f32 %v120, %v182
  %v217 = vadd.f32 %v121, %v185
  %v218 = vadd.f32 %v122, %v188
  %v219 = vadd.f32 %v123, %v191
  %v220 = vadd.f32 %v124, %v194
  %v221 = vadd.f32 %v125, %v197
  %v222 = vadd.f32 %v126, %v200
  %v223 = vadd.f32 %v127, %v203
  %v224 = vadd.f32 %v128, %v206
  %v225 = vadd.f32 %v129, %v209
  %vm226 = vcmask 7168
  %227 = vst.msk [vmem:[#allocation3] sm:$0xff] %vm226, %v210
  %228 = vst.msk [vmem:[#allocation3 + $0x8] sm:$0xff] %vm226, %v211
  %229 = vst.msk [vmem:[#allocation3 + $0x10] sm:$0xff] %vm226, %v212
  %230 = vst.msk [vmem:[#allocation3 + $0x18] sm:$0xff] %vm226, %v213
  %231 = vst.msk [vmem:[#allocation3 + $0x20] sm:$0xff] %vm226, %v214
  %232 = vst.msk [vmem:[#allocation3 + $0x28] sm:$0xff] %vm226, %v215
  %233 = vst.msk [vmem:[#allocation3 + $0x30] sm:$0xff] %vm226, %v216
  %234 = vst.msk [vmem:[#allocation3 + $0x38] sm:$0xff] %vm226, %v217
  %235 = vst.msk [vmem:[#allocation3 + $0x40] sm:$0xff] %vm226, %v218
  %236 = vst.msk [vmem:[#allocation3 + $0x48] sm:$0xff] %vm226, %v219
  %237 = vst.msk [vmem:[#allocation3 + $0x50] sm:$0xff] %vm226, %v220
  %238 = vst.msk [vmem:[#allocation3 + $0x58] sm:$0xff] %vm226, %v221
  %239 = vst.msk [vmem:[#allocation3 + $0x60] sm:$0xff] %vm226, %v222
  %240 = vst.msk [vmem:[#allocation3 + $0x68] sm:$0xff] %vm226, %v223
  %241 = vst.msk [vmem:[#allocation3 + $0x70] sm:$0xff] %vm226, %v224
  %242 = vst.msk [vmem:[#allocation3 + $0x78] sm:$0xff] %vm226, %v225
  %v243 = vld [vmem:[#allocation4] sm:$0x1]
  %v244 = vmul.f32 %v82, %v82
  %v245 = vmul.f32 %v83, %v83
  %v246 = vmul.f32 %v84, %v84
  %v247 = vmul.f32 %v85, %v85
  %v248 = vmul.f32 %v86, %v86
  %v249 = vmul.f32 %v87, %v87
  %v250 = vmul.f32 %v88, %v88
  %v251 = vmul.f32 %v89, %v89
  %v252 = vmul.f32 %v90, %v90
  %v253 = vmul.f32 %v91, %v91
  %v254 = vmul.f32 %v92, %v92
  %v255 = vmul.f32 %v93, %v93
  %v256 = vmul.f32 %v94, %v94
  %v257 = vmul.f32 %v95, %v95
  %v258 = vmul.f32 %v96, %v96
  %v259 = vmul.f32 %v97, %v97
  %v260 = vmul.f32 %v98, %v98
  %v261 = vmul.f32 %v99, %v99
  %v262 = vmul.f32 %v100, %v100
  %v263 = vmul.f32 %v101, %v101
  %v264 = vmul.f32 %v102, %v102
  %v265 = vmul.f32 %v103, %v103
  %v266 = vmul.f32 %v104, %v104
  %v267 = vmul.f32 %v105, %v105
  %v268 = vmul.f32 %v106, %v106
  %v269 = vmul.f32 %v107, %v107
  %v270 = vmul.f32 %v108, %v108
  %v271 = vmul.f32 %v109, %v109
  %v272 = vmul.f32 %v110, %v110
  %v273 = vmul.f32 %v111, %v111
  %v274 = vmul.f32 %v112, %v112
  %v275 = vmul.f32 %v113, %v113
  %v276 = vadd.f32 %v244, %v245
  %v277 = vadd.f32 %v276, %v246
  %v278 = vadd.f32 %v277, %v247
  %v279 = vadd.f32 %v278, %v248
  %v280 = vadd.f32 %v279, %v249
  %v281 = vadd.f32 %v280, %v250
  %v282 = vadd.f32 %v281, %v251
  %v283 = vadd.f32 %v282, %v252
  %v284 = vadd.f32 %v283, %v253
  %v285 = vadd.f32 %v284, %v254
  %v286 = vadd.f32 %v285, %v255
  %v287 = vadd.f32 %v286, %v256
  %v288 = vadd.f32 %v287, %v257
  %v289 = vadd.f32 %v288, %v258
  %v290 = vadd.f32 %v289, %v259
  %v291 = vadd.f32 %v290, %v260
  %v292 = vadd.f32 %v291, %v261
  %v293 = vadd.f32 %v292, %v262
  %v294 = vadd.f32 %v293, %v263
  %v295 = vadd.f32 %v294, %v264
  %v296 = vadd.f32 %v295, %v265
  %v297 = vadd.f32 %v296, %v266
  %v298 = vadd.f32 %v297, %v267
  %v299 = vadd.f32 %v298, %v268
  %v300 = vadd.f32 %v299, %v269
  %v301 = vadd.f32 %v300, %v270
  %v302 = vadd.f32 %v301, %v271
  %v303 = vadd.f32 %v302, %v272
  %v304 = vadd.f32 %v303, %v273
  %v305 = vadd.f32 %v304, %v274
  %v306 = vadd.f32 %v305, %v275
  %v307 = vrot.slane %v306, 4
  %v308 = vadd.f32 %v306, %v307
  %v309 = vrot.slane %v308, 2
  %v310 = vadd.f32 %v308, %v309
  %v311 = vrot.slane %v310, 1
  %v312 = vadd.f32 %v310, %v311
  %v313 = vadd.f32 %v243, %v312
  %314 = vst [vmem:[#allocation4] sm:$0x1] %v313
  %v315 = vld [vmem:[#allocation2] sm:$0xff]
  %v316 = vld [vmem:[#allocation2 + $0x8] sm:$0xff]
  %v317 = vld [vmem:[#allocation2 + $0x10] sm:$0xff]
  %v318 = vld [vmem:[#allocation2 + $0x18] sm:$0xff]
  %v319 = vld [vmem:[#allocation2 + $0x20] sm:$0xff]
  %v320 = vld [vmem:[#allocation2 + $0x28] sm:$0xff]
  %v321 = vld [vmem:[#allocation2 + $0x30] sm:$0xff]
  %v322 = vld [vmem:[#allocation2 + $0x38] sm:$0xff]
  %v323 = vld [vmem:[#allocation2 + $0x40] sm:$0xff]
  %v324 = vld [vmem:[#allocation2 + $0x48] sm:$0xff]
  %v325 = vld [vmem:[#allocation2 + $0x50] sm:$0xff]
  %v326 = vld [vmem:[#allocation2 + $0x58] sm:$0xff]
  %v327 = vld [vmem:[#allocation2 + $0x60] sm:$0xff]
  %v328 = vld [vmem:[#allocation2 + $0x68] sm:$0xff]
  %v329 = vld [vmem:[#allocation2 + $0x70] sm:$0xff]
  %v330 = vld [vmem:[#allocation2 + $0x78] sm:$0xff]
  %v331 = vpack.c.bf16 %v52, %v50
  %v332 = vpack.c.bf16 %v53, %v51
  %v333 = vpack.c.bf16 %v56, %v54
  %v334 = vpack.c.bf16 %v57, %v55
  %v335 = vpack.c.bf16 %v60, %v58
  %v336 = vpack.c.bf16 %v61, %v59
  %v337 = vpack.c.bf16 %v64, %v62
  %v338 = vpack.c.bf16 %v65, %v63
  %v339 = vpack.c.bf16 %v68, %v66
  %v340 = vpack.c.bf16 %v69, %v67
  %v341 = vpack.c.bf16 %v72, %v70
  %v342 = vpack.c.bf16 %v73, %v71
  %v343 = vpack.c.bf16 %v76, %v74
  %v344 = vpack.c.bf16 %v77, %v75
  %v345 = vpack.c.bf16 %v80, %v78
  %v346 = vpack.c.bf16 %v81, %v79
  %v347 = vpack.c.bf16 %v83, %v82
  %v348 = vpack.c.bf16 %v85, %v84
  %v349 = vpack.c.bf16 %v87, %v86
  %v350 = vpack.c.bf16 %v89, %v88
  %v351 = vpack.c.bf16 %v91, %v90
  %v352 = vpack.c.bf16 %v93, %v92
  %v353 = vpack.c.bf16 %v95, %v94
  %v354 = vpack.c.bf16 %v97, %v96
  %v355 = vpack.c.bf16 %v99, %v98
  %v356 = vpack.c.bf16 %v101, %v100
  %v357 = vpack.c.bf16 %v103, %v102
  %v358 = vpack.c.bf16 %v105, %v104
  %v359 = vpack.c.bf16 %v107, %v106
  %v360 = vpack.c.bf16 %v109, %v108
  %v361 = vpack.c.bf16 %v111, %v110
  %v362 = vpack.c.bf16 %v113, %v112
  %363 = vmatprep.subr.bf16.mxu0 0
  %364 = vmatpush1.bf16.msra.mxu0 %v347
  %365 = vmatprep.subr.bf16.mxu0 0
  %366 = vmatpush1.bf16.msra.mxu0 %v348
  %367 = vmatprep.subr.bf16.mxu0 0
  %368 = vmatpush1.bf16.msra.mxu0 %v349
  %369 = vmatprep.subr.bf16.mxu0 0
  %370 = vmatpush1.bf16.msra.mxu0 %v350
  %371 = vmatprep.subr.bf16.mxu0 0
  %372 = vmatpush1.bf16.msra.mxu0 %v351
  %373 = vmatprep.subr.bf16.mxu0 0
  %374 = vmatpush1.bf16.msra.mxu0 %v352
  %375 = vmatprep.subr.bf16.mxu0 0
  %376 = vmatpush1.bf16.msra.mxu0 %v353
  %377 = vmatprep.subr.bf16.mxu0 0
  %378 = vmatpush1.bf16.msra.mxu0 %v354
  %379 = vmatprep.subr.bf16.mxu0 0
  %380 = vmatpush1.bf16.msra.mxu0 %v355
  %381 = vmatprep.subr.bf16.mxu0 0
  %382 = vmatpush1.bf16.msra.mxu0 %v356
  %383 = vmatprep.subr.bf16.mxu0 0
  %384 = vmatpush1.bf16.msra.mxu0 %v357
  %385 = vmatprep.subr.bf16.mxu0 0
  %386 = vmatpush1.bf16.msra.mxu0 %v358
  %387 = vmatprep.subr.bf16.mxu0 0
  %388 = vmatpush1.bf16.msra.mxu0 %v359
  %389 = vmatprep.subr.bf16.mxu0 0
  %390 = vmatpush1.bf16.msra.mxu0 %v360
  %391 = vmatprep.subr.bf16.mxu0 0
  %392 = vmatpush1.bf16.msra.mxu0 %v361
  %393 = vmatprep.subr.bf16.mxu0 0
  %394 = vmatpush1.bf16.msra.mxu0 %v362
  %395 = vmatprep.mubr.bf16.mxu0 %v332
  %396 = vmatmul.mubr.bf16.gmra.mrb[0].mxu0 %v331
  %v397 = vpop.f32.mrb[0].mxu0
  %v398 = vadd.f32 0.0, %v397
  %v399 = vpop.f32.mrb[0].mxu0
  %v400 = vpop.f32.mrb[0].mxu0
  %v401 = vadd.f32 0.0, %v400
  %v402 = vpop.f32.mrb[0].mxu0
  %403 = vmatprep.mubr.bf16.mxu0 %v334
  %404 = vmatmul.mubr.bf16.gmra.mrb[0].mxu0 %v333
  %v405 = vpop.f32.mrb[0].mxu0
  %v406 = vadd.f32 0.0, %v405
  %v407 = vpop.f32.mrb[0].mxu0
  %v408 = vpop.f32.mrb[0].mxu0
  %v409 = vadd.f32 0.0, %v408
  %v410 = vpop.f32.mrb[0].mxu0
  %411 = vmatprep.mubr.bf16.mxu0 %v336
  %412 = vmatmul.mubr.bf16.gmra.mrb[0].mxu0 %v335
  %v413 = vpop.f32.mrb[0].mxu0
  %v414 = vadd.f32 0.0, %v413
  %v415 = vpop.f32.mrb[0].mxu0
  %v416 = vpop.f32.mrb[0].mxu0
  %v417 = vadd.f32 0.0, %v416
  %v418 = vpop.f32.mrb[0].mxu0
  %419 = vmatprep.mubr.bf16.mxu0 %v338
  %420 = vmatmul.mubr.bf16.gmra.mrb[0].mxu0 %v337
  %v421 = vpop.f32.mrb[0].mxu0
  %v422 = vadd.f32 0.0, %v421
  %v423 = vpop.f32.mrb[0].mxu0
  %v424 = vpop.f32.mrb[0].mxu0
  %v425 = vadd.f32 0.0, %v424
  %v426 = vpop.f32.mrb[0].mxu0
  %427 = vmatprep.mubr.bf16.mxu0 %v340
  %428 = vmatmul.mubr.bf16.gmra.mrb[0].mxu0 %v339
  %v429 = vpop.f32.mrb[0].mxu0
  %v430 = vadd.f32 0.0, %v429
  %v431 = vpop.f32.mrb[0].mxu0
  %v432 = vpop.f32.mrb[0].mxu0
  %v433 = vadd.f32 0.0, %v432
  %v434 = vpop.f32.mrb[0].mxu0
  %435 = vmatprep.mubr.bf16.mxu0 %v342
  %436 = vmatmul.mubr.bf16.gmra.mrb[0].mxu0 %v341
  %v437 = vpop.f32.mrb[0].mxu0
  %v438 = vadd.f32 0.0, %v437
  %v439 = vpop.f32.mrb[0].mxu0
  %v440 = vpop.f32.mrb[0].mxu0
  %v441 = vadd.f32 0.0, %v440
  %v442 = vpop.f32.mrb[0].mxu0
  %443 = vmatprep.mubr.bf16.mxu0 %v344
  %444 = vmatmul.mubr.bf16.gmra.mrb[0].mxu0 %v343
  %v445 = vpop.f32.mrb[0].mxu0
  %v446 = vadd.f32 0.0, %v445
  %v447 = vpop.f32.mrb[0].mxu0
  %v448 = vpop.f32.mrb[0].mxu0
  %v449 = vadd.f32 0.0, %v448
  %v450 = vpop.f32.mrb[0].mxu0
  %451 = vmatprep.mubr.bf16.mxu0 %v346
  %452 = vmatmul.mubr.bf16.gmra.mrb[0].mxu0 %v345
  %v453 = vpop.f32.mrb[0].mxu0
  %v454 = vadd.f32 0.0, %v453
  %v455 = vpop.f32.mrb[0].mxu0
  %v456 = vpop.f32.mrb[0].mxu0
  %v457 = vadd.f32 0.0, %v456
  %v458 = vpop.f32.mrb[0].mxu0
  %459 = vdwg.mxu0
  %v460 = vadd.f32 %v315, %v398
  %v461 = vadd.f32 %v316, %v401
  %v462 = vadd.f32 %v317, %v406
  %v463 = vadd.f32 %v318, %v409
  %v464 = vadd.f32 %v319, %v414
  %v465 = vadd.f32 %v320, %v417
  %v466 = vadd.f32 %v321, %v422
  %v467 = vadd.f32 %v322, %v425
  %v468 = vadd.f32 %v323, %v430
  %v469 = vadd.f32 %v324, %v433
  %v470 = vadd.f32 %v325, %v438
  %v471 = vadd.f32 %v326, %v441
  %v472 = vadd.f32 %v327, %v446
  %v473 = vadd.f32 %v328, %v449
  %v474 = vadd.f32 %v329, %v454
  %v475 = vadd.f32 %v330, %v457
  %476 = vst [vmem:[#allocation2] sm:$0xff] %v460
  %477 = vst [vmem:[#allocation2 + $0x8] sm:$0xff] %v461
  %478 = vst [vmem:[#allocation2 + $0x10] sm:$0xff] %v462
  %479 = vst [vmem:[#allocation2 + $0x18] sm:$0xff] %v463
  %480 = vst [vmem:[#allocation2 + $0x20] sm:$0xff] %v464
  %481 = vst [vmem:[#allocation2 + $0x28] sm:$0xff] %v465
  %482 = vst [vmem:[#allocation2 + $0x30] sm:$0xff] %v466
  %483 = vst [vmem:[#allocation2 + $0x38] sm:$0xff] %v467
  %484 = vst [vmem:[#allocation2 + $0x40] sm:$0xff] %v468
  %485 = vst [vmem:[#allocation2 + $0x48] sm:$0xff] %v469
  %486 = vst [vmem:[#allocation2 + $0x50] sm:$0xff] %v470
  %487 = vst [vmem:[#allocation2 + $0x58] sm:$0xff] %v471
  %488 = vst [vmem:[#allocation2 + $0x60] sm:$0xff] %v472
  %489 = vst [vmem:[#allocation2 + $0x68] sm:$0xff] %v473
  %490 = vst [vmem:[#allocation2 + $0x70] sm:$0xff] %v474
  %491 = vst [vmem:[#allocation2 + $0x78] sm:$0xff] %v475
  // Predicated region
  $region14: #{normed_linear.1} parent=0 // pred_check
    %p492 = pneg %p12
  $region15: #{normed_linear.1} parent=0 // pred_check_branch
    %494 = sbr.rel (%p492) target = $region17
  $region16: #{normed_linear.1} parent=0 // pred_region
    %v495 = vld [vmem:[#allocation3] sm:$0xff]
    %v496 = vld [vmem:[#allocation3 + $0x8] sm:$0xff]
    %v497 = vld [vmem:[#allocation3 + $0x10] sm:$0xff]
    %v498 = vld [vmem:[#allocation3 + $0x18] sm:$0xff]
    %v499 = vld [vmem:[#allocation3 + $0x20] sm:$0xff]
    %v500 = vld [vmem:[#allocation3 + $0x28] sm:$0xff]
    %v501 = vld [vmem:[#allocation3 + $0x30] sm:$0xff]
    %v502 = vld [vmem:[#allocation3 + $0x38] sm:$0xff]
    %v503 = vld [vmem:[#allocation3 + $0x40] sm:$0xff]
    %v504 = vld [vmem:[#allocation3 + $0x48] sm:$0xff]
    %v505 = vld [vmem:[#allocation3 + $0x50] sm:$0xff]
    %v506 = vld [vmem:[#allocation3 + $0x58] sm:$0xff]
    %v507 = vld [vmem:[#allocation3 + $0x60] sm:$0xff]
    %v508 = vld [vmem:[#allocation3 + $0x68] sm:$0xff]
    %v509 = vld [vmem:[#allocation3 + $0x70] sm:$0xff]
    %v510 = vld [vmem:[#allocation3 + $0x78] sm:$0xff]
    %v511 = vmax.f32 %v495, 1e-24
    %v512 = vmax.f32 %v496, 1e-24
    %v513 = vmax.f32 %v497, 1e-24
    %v514 = vmax.f32 %v498, 1e-24
    %v515 = vmax.f32 %v499, 1e-24
    %v516 = vmax.f32 %v500, 1e-24
    %v517 = vmax.f32 %v501, 1e-24
    %v518 = vmax.f32 %v502, 1e-24
    %v519 = vmax.f32 %v503, 1e-24
    %v520 = vmax.f32 %v504, 1e-24
    %v521 = vmax.f32 %v505, 1e-24
    %v522 = vmax.f32 %v506, 1e-24
    %v523 = vmax.f32 %v507, 1e-24
    %v524 = vmax.f32 %v508, 1e-24
    %v525 = vmax.f32 %v509, 1e-24
    %v526 = vmax.f32 %v510, 1e-24
    %v527 = vrsqrt.pop %v511
    %v528 = vrsqrt.pop %v512
    %v529 = vrsqrt.pop %v513
    %v530 = vrsqrt.pop %v514
    %v531 = vrsqrt.pop %v515
    %v532 = vrsqrt.pop %v516
    %v533 = vrsqrt.pop %v517
    %v534 = vrsqrt.pop %v518
    %v535 = vrsqrt.pop %v519
    %v536 = vrsqrt.pop %v520
    %v537 = vrsqrt.pop %v521
    %v538 = vrsqrt.pop %v522
    %v539 = vrsqrt.pop %v523
    %v540 = vrsqrt.pop %v524
    %v541 = vrsqrt.pop %v525
    %v542 = vrsqrt.pop %v526
    %v543 = vld [vmem:[#allocation4] sm:$0x1]
    %v544 = vmax.f32 %v543, 1e-24
    %v545 = vrsqrt.pop %v544
    %v546 = vld [vmem:[#allocation2] sm:$0xff]
    %v547 = vld [vmem:[#allocation2 + $0x8] sm:$0xff]
    %v548 = vld [vmem:[#allocation2 + $0x10] sm:$0xff]
    %v549 = vld [vmem:[#allocation2 + $0x18] sm:$0xff]
    %v550 = vld [vmem:[#allocation2 + $0x20] sm:$0xff]
    %v551 = vld [vmem:[#allocation2 + $0x28] sm:$0xff]
    %v552 = vld [vmem:[#allocation2 + $0x30] sm:$0xff]
    %v553 = vld [vmem:[#allocation2 + $0x38] sm:$0xff]
    %v554 = vld [vmem:[#allocation2 + $0x40] sm:$0xff]
    %v555 = vld [vmem:[#allocation2 + $0x48] sm:$0xff]
    %v556 = vld [vmem:[#allocation2 + $0x50] sm:$0xff]
    %v557 = vld [vmem:[#allocation2 + $0x58] sm:$0xff]
    %v558 = vld [vmem:[#allocation2 + $0x60] sm:$0xff]
    %v559 = vld [vmem:[#allocation2 + $0x68] sm:$0xff]
    %v560 = vld [vmem:[#allocation2 + $0x70] sm:$0xff]
    %v561 = vld [vmem:[#allocation2 + $0x78] sm:$0xff]
    %563 = vset.pattern.permute.xlu0 0
    %564 = vperm.xlu0 %563, %v527
    %v565 = vpop.permute.xlu0 %564
    %568 = vset.pattern.permute.xlu0 0
    %569 = vperm.xlu0 %568, %v528
    %v570 = vpop.permute.xlu0 %569
    %573 = vset.pattern.permute.xlu0 0
    %574 = vperm.xlu0 %573, %v529
    %v575 = vpop.permute.xlu0 %574
    %578 = vset.pattern.permute.xlu0 0
    %579 = vperm.xlu0 %578, %v530
    %v580 = vpop.permute.xlu0 %579
    %583 = vset.pattern.permute.xlu0 0
    %584 = vperm.xlu0 %583, %v531
    %v585 = vpop.permute.xlu0 %584
    %588 = vset.pattern.permute.xlu0 0
    %589 = vperm.xlu0 %588, %v532
    %v590 = vpop.permute.xlu0 %589
    %593 = vset.pattern.permute.xlu0 0
    %594 = vperm.xlu0 %593, %v533
    %v595 = vpop.permute.xlu0 %594
    %598 = vset.pattern.permute.xlu0 0
    %599 = vperm.xlu0 %598, %v534
    %v600 = vpop.permute.xlu0 %599
    %603 = vset.pattern.permute.xlu0 0
    %604 = vperm.xlu0 %603, %v535
    %v605 = vpop.permute.xlu0 %604
    %608 = vset.pattern.permute.xlu0 0
    %609 = vperm.xlu0 %608, %v536
    %v610 = vpop.permute.xlu0 %609
    %613 = vset.pattern.permute.xlu0 0
    %614 = vperm.xlu0 %613, %v537
    %v615 = vpop.permute.xlu0 %614
    %618 = vset.pattern.permute.xlu0 0
    %619 = vperm.xlu0 %618, %v538
    %v620 = vpop.permute.xlu0 %619
    %623 = vset.pattern.permute.xlu0 0
    %624 = vperm.xlu0 %623, %v539
    %v625 = vpop.permute.xlu0 %624
    %628 = vset.pattern.permute.xlu0 0
    %629 = vperm.xlu0 %628, %v540
    %v630 = vpop.permute.xlu0 %629
    %633 = vset.pattern.permute.xlu0 0
    %634 = vperm.xlu0 %633, %v541
    %v635 = vpop.permute.xlu0 %634
    %638 = vset.pattern.permute.xlu0 0
    %639 = vperm.xlu0 %638, %v542
    %v640 = vpop.permute.xlu0 %639
    %v642 = vmul.f32 %v546, %v565
    %v643 = vmul.f32 %v547, %v570
    %v644 = vmul.f32 %v548, %v575
    %v645 = vmul.f32 %v549, %v580
    %v646 = vmul.f32 %v550, %v585
    %v647 = vmul.f32 %v551, %v590
    %v648 = vmul.f32 %v552, %v595
    %v649 = vmul.f32 %v553, %v600
    %v650 = vmul.f32 %v554, %v605
    %v651 = vmul.f32 %v555, %v610
    %v652 = vmul.f32 %v556, %v615
    %v653 = vmul.f32 %v557, %v620
    %v654 = vmul.f32 %v558, %v625
    %v655 = vmul.f32 %v559, %v630
    %v656 = vmul.f32 %v560, %v635
    %v657 = vmul.f32 %v561, %v640
    %v659 = vlaneseq
    %v660 = vshrl.u32 %v659, 7
    %v661 = vsub.s32 0, %v660
    %v662 = vrot.slane %v545, %v661
    %v664 = vmul.f32 %v642, %v662
    %v665 = vmul.f32 %v643, %v662
    %v666 = vmul.f32 %v644, %v662
    %v667 = vmul.f32 %v645, %v662
    %v668 = vmul.f32 %v646, %v662
    %v669 = vmul.f32 %v647, %v662
    %v670 = vmul.f32 %v648, %v662
    %v671 = vmul.f32 %v649, %v662
    %v672 = vmul.f32 %v650, %v662
    %v673 = vmul.f32 %v651, %v662
    %v674 = vmul.f32 %v652, %v662
    %v675 = vmul.f32 %v653, %v662
    %v676 = vmul.f32 %v654, %v662
    %v677 = vmul.f32 %v655, %v662
    %v678 = vmul.f32 %v656, %v662
    %v679 = vmul.f32 %v657, %v662
    %680 = vst [vmem:[%s2] sm:$0xff] %v664
    %681 = vst [vmem:[%s2 + $0x8] sm:$0xff] %v665
    %682 = vst [vmem:[%s2 + $0x10] sm:$0xff] %v666
    %683 = vst [vmem:[%s2 + $0x18] sm:$0xff] %v667
    %684 = vst [vmem:[%s2 + $0x20] sm:$0xff] %v668
    %685 = vst [vmem:[%s2 + $0x28] sm:$0xff] %v669
    %686 = vst [vmem:[%s2 + $0x30] sm:$0xff] %v670
    %687 = vst [vmem:[%s2 + $0x38] sm:$0xff] %v671
    %688 = vst [vmem:[%s2 + $0x40] sm:$0xff] %v672
    %689 = vst [vmem:[%s2 + $0x48] sm:$0xff] %v673
    %690 = vst [vmem:[%s2 + $0x50] sm:$0xff] %v674
    %691 = vst [vmem:[%s2 + $0x58] sm:$0xff] %v675
    %692 = vst [vmem:[%s2 + $0x60] sm:$0xff] %v676
    %693 = vst [vmem:[%s2 + $0x68] sm:$0xff] %v677
    %694 = vst [vmem:[%s2 + $0x70] sm:$0xff] %v678
    %695 = vst [vmem:[%s2 + $0x78] sm:$0xff] %v679
  $region17: #{normed_linear.1} parent=0 // pred_fallthru
    _
  // Predicated region
  $region18: #{normed_linear.1} parent=0 // pred_check
    _
  $region19: #{normed_linear.1} parent=0 // pred_check_branch
    %697 = sbr.rel (0) target = $region21
  $region20: #{normed_linear.1} parent=0 // pred_region
    _
  $region21: #{normed_linear.1} parent=0 // pred_fallthru
    _
  // Predicated region
  $region22: #{normed_linear.1} parent=0 // pred_check
    _
  $region23: #{normed_linear.1} parent=0 // pred_check_branch
    %699 = sbr.rel (0) target = $region25
  $region24: #{normed_linear.1} parent=0 // pred_region
    _
  $region25: #{normed_linear.1} parent=0 // pred_fallthru
    _

</llo_original>
